<compile_context>
chip_gen: v5e
topology: v5e:2x2
jax: 0.10.0
libtpu: 0.0.40
codegen_flags: <defaults>
</compile_context>

<pallas_src>
import functools

import jax
import jax.numpy as jnp
from jax.experimental import pallas as pl
from jax.experimental.pallas import tpu as pltpu


def _round_up(n, m):
    return ((n + m - 1) // m) * m


# ----------------------------- Pallas kernel -------------------------------
def _crossnet_v2_kernel(x_ref, wt_ref, b_ref, wp_ref, bp_ref, o_ref, *, cn_layers):
    """One batch tile of CrossNetworkV2 + prediction Linear, all in VMEM.

    x_ref  : (TB, D)    embedded & concatenated features (batch tile)
    wt_ref : (L, D, D)  stacked cross-layer weights, PRE-TRANSPOSED (in, out)
    b_ref  : (L, 1, D)  stacked cross-layer bias vectors
    wp_ref : (1, D)     prediction Linear weight (torch layout: (out, in))
    bp_ref : (1, 1)     prediction Linear bias
    o_ref  : (TB, 1)    output logits for this batch tile
    """
    x0 = x_ref[...].astype(jnp.float32)
    x = x0

    # Hoist prediction-head operands out of the layer loop (no re-broadcast).
    wp = wp_ref[...].astype(jnp.float32)   # (1, D)
    bp = bp_ref[...].astype(jnp.float32)   # (1, 1)

    # cn_layers is a small static int -> unrolled Python loop.
    for i in range(cn_layers):
        w_i = wt_ref[i]                    # (D, D), already (in, out)
        b_i = b_ref[i]                     # (1, D)
        # torch: xw = x @ W.T  ==  x @ w_i  (w_i pre-transposed in wrapper).
        xw = jnp.dot(x, w_i, preferred_element_type=jnp.float32)
        x = x0 * (xw + b_i) + x

    # Prediction layer as a VPU multiply + lane reduce (avoid N=1 MXU matmul).
    y = jnp.sum(x * wp, axis=-1, keepdims=True) + bp      # (TB, 1)
    o_ref[...] = y.astype(o_ref.dtype)


def crossnet_v2_pallas(x_embed, w_stack, b_stack, w_pred, b_pred, *, batch_tile=512):
    """x_embed: (B, D) f32; w_stack: (L, D, D) torch layout; b_stack: (L, D);
    w_pred: (1, D); b_pred: (1, 1).  Returns (B, 1) f32 logits."""
    B, D = x_embed.shape
    L = w_stack.shape[0]

    # One-time layout plumbing outside the kernel:
    #   weights (out, in) -> (in, out); biases (L, D) -> (L, 1, D).
    w_t = jnp.transpose(w_stack, (0, 2, 1))
    b_r = b_stack.reshape(L, 1, D)

    # Batch tile: multiple of 8 sublanes, capped by requested tile size.
    TB = _round_up(min(batch_tile, _round_up(B, 8)), 8)
    B_pad = _round_up(B, TB)
    if B_pad != B:
        x_embed = jnp.pad(x_embed, ((0, B_pad - B), (0, 0)))
    nb = B_pad // TB

    f32 = 4
    # Advisory cost hint for XLA scheduling around the custom call.
    cost = pl.CostEstimate(
        flops=2 * B_pad * D * D * L + 2 * B_pad * D,
        transcendentals=0,
        bytes_accessed=(B_pad * D + B_pad + L * D * D + L * D + D + 1) * f32,
    )

    # VMEM budget: double-buffered x tile + output tile, resident
    # weights/biases (counted x2 conservatively), plus live x0/x/xw copies.
    vmem_needed = (2 * (TB * D + TB) + 2 * (L * D * D + L * D + D + 1)
                   + 3 * TB * D) * f32
    vmem_limit = int(min(max(4 * vmem_needed, 8 << 20), 48 << 20))

    kernel = functools.partial(_crossnet_v2_kernel, cn_layers=L)

    out = pl.pallas_call(
        kernel,
        out_shape=jax.ShapeDtypeStruct((B_pad, 1), jnp.float32),
        grid_spec=pltpu.PrefetchScalarGridSpec(
            num_scalar_prefetch=0,
            grid=(nb,),
            in_specs=[
                # Batch-tiled activations: auto double-buffered DMA.
                pl.BlockSpec((TB, D), lambda i: (i, 0)),
                # Weights / biases: constant block index -> fetched once,
                # resident in VMEM across the whole batch grid.
                pl.BlockSpec((L, D, D), lambda i: (0, 0, 0)),
                pl.BlockSpec((L, 1, D), lambda i: (0, 0, 0)),
                pl.BlockSpec((1, D), lambda i: (0, 0)),
                pl.BlockSpec((1, 1), lambda i: (0, 0)),
            ],
            out_specs=pl.BlockSpec((TB, 1), lambda i: (i, 0)),
        ),
        compiler_params=pltpu.CompilerParams(
            dimension_semantics=("parallel",),   # shard batch tiles across TCs
            vmem_limit_bytes=vmem_limit,
        ),
        cost_estimate=cost,
    )(x_embed, w_t, b_r, w_pred, b_pred)

    return out[:B]


# ------------------------------- glue (JAX) ---------------------------------
def features_embedding(x_idx, table, offsets):
    """FeaturesEmbedding with concat=True.

    x_idx   : (B, num_fields) int32 per-field indices
    table   : (sum(field_dims), embed_dim)
    offsets : (num_fields,) cumulative field offsets
    returns : (B, num_fields * embed_dim)
    """
    global_idx = x_idx + offsets[None, :]              # (B, F)
    emb = jnp.take(table, global_idx, axis=0)          # (B, F, E)
    B = x_idx.shape[0]
    return emb.reshape(B, -1)


def crossnet_v2_forward(x_idx, params, *, batch_tile=512):
    x_embed = features_embedding(x_idx, params["emb_table"], params["offsets"])
    return crossnet_v2_pallas(
        x_embed.astype(jnp.float32),
        params["cross_w"],
        params["cross_b"],
        params["pred_w"],
        params["pred_b"],
        batch_tile=batch_tile,
    )


def _reference_forward(x_idx, params):
    """Pure-JAX reference mirroring the PyTorch module (for validation)."""
    x0 = features_embedding(x_idx, params["emb_table"], params["offsets"]).astype(jnp.float32)
    x = x0
    for i in range(params["cross_w"].shape[0]):
        xw = x @ params["cross_w"][i].T
        x = x0 * (xw + params["cross_b"][i]) + x
    return x @ params["pred_w"].T + params["pred_b"]


# ----------------------------------- main ------------------------------------
if __name__ == "__main__":
    # Small, module-consistent shapes: 4 categorical fields, embed_dim=8 -> D=32
    field_dims = (5, 7, 3, 6)
    embed_dim = 8
    num_fields = len(field_dims)
    embed_output_dim = num_fields * embed_dim           # 32
    cn_layers = 3
    batch = 20                                          # exercises tiling + tail padding

    key = jax.random.PRNGKey(0)
    k_tab, k_w, k_b, k_wp, k_bp, k_x = jax.random.split(key, 6)

    # Deterministic synthetic parameters (shapes match the torch module).
    emb_table = 0.1 * jax.random.normal(
        k_tab, (sum(field_dims), embed_dim), dtype=jnp.float32)
    offsets = jnp.array(
        [0] + list(jnp.cumsum(jnp.array(field_dims))[:-1]), dtype=jnp.int32)
    cross_w = 0.1 * jax.random.normal(
        k_w, (cn_layers, embed_output_dim, embed_output_dim), dtype=jnp.float32)
    cross_b = 0.05 * jax.random.normal(
        k_b, (cn_layers, embed_output_dim), dtype=jnp.float32)
    pred_w = 0.1 * jax.random.normal(
        k_wp, (1, embed_output_dim), dtype=jnp.float32)
    pred_b = 0.05 * jax.random.normal(k_bp, (1, 1), dtype=jnp.float32)

    params = dict(
        emb_table=emb_table, offsets=offsets,
        cross_w=cross_w, cross_b=cross_b,
        pred_w=pred_w, pred_b=pred_b,
    )

    # Integer categorical inputs, one index per field.
    maxes = jnp.array(field_dims, dtype=jnp.int32)
    x_idx = (jax.random.randint(k_x, (batch, num_fields), 0, 10**6) % maxes).astype(jnp.int32)

    # Small batch tile so the demo runs a >1-step grid (20 rows -> 3 tiles of 8).
    out = crossnet_v2_forward(x_idx, params, batch_tile=8)
    out = jax.block_until_ready(out)

    ref = _reference_forward(x_idx, params)
    assert out.shape == (batch, 1)
    assert jnp.allclose(out, ref, atol=1e-5, rtol=1e-5)

    print("KERNEL_OK")
</pallas_src>

<mosaic_0001>
module attributes {stable_mosaic.version = 11 : i64} {
  func.func @_crossnet_v2_kernel(%arg0: i32, %arg1: memref<8x32xf32, #tpu.memory_space<vmem>>, %arg2: memref<3x32x32xf32, #tpu.memory_space<vmem>>, %arg3: memref<3x1x32xf32, #tpu.memory_space<vmem>>, %arg4: memref<1x32xf32, #tpu.memory_space<vmem>>, %arg5: memref<1x1xf32, #tpu.memory_space<vmem>>, %arg6: memref<8x1xf32, #tpu.memory_space<vmem>>) attributes {dimension_semantics = [#tpu.dimension_semantics<parallel>], iteration_bounds = array<i64: 3>, scalar_prefetch = 0 : i64, scratch_operands = 0 : i64, tpu.core_type = #tpu.core_type<tc>, window_params = [{transform_indices = @transform_0, window_bounds = array<i64: 8, 32>}, {pipeline_mode = #tpu.pipeline_mode<synchronous>, transform_indices = @transform_1, window_bounds = array<i64: 3, 32, 32>}, {pipeline_mode = #tpu.pipeline_mode<synchronous>, transform_indices = @transform_2, window_bounds = array<i64: 3, 1, 32>}, {pipeline_mode = #tpu.pipeline_mode<synchronous>, transform_indices = @transform_3, window_bounds = array<i64: 1, 32>}, {pipeline_mode = #tpu.pipeline_mode<synchronous>, transform_indices = @transform_4, window_bounds = array<i64: 1, 1>}, {transform_indices = @transform_5, window_bounds = array<i64: 8, 1>}]} {
    %c0 = arith.constant 0 : index
    %c0_0 = arith.constant 0 : index
    %0 = vector.load %arg1[%c0, %c0_0] : memref<8x32xf32, #tpu.memory_space<vmem>>, vector<8x32xf32>
    %c0_1 = arith.constant 0 : index
    %c0_2 = arith.constant 0 : index
    %1 = vector.load %arg4[%c0_1, %c0_2] : memref<1x32xf32, #tpu.memory_space<vmem>>, vector<1x32xf32>
    %c0_3 = arith.constant 0 : index
    %c0_4 = arith.constant 0 : index
    %2 = vector.load %arg5[%c0_3, %c0_4] : memref<1x1xf32, #tpu.memory_space<vmem>>, vector<1x1xf32>
    %c0_5 = arith.constant 0 : index
    %c0_6 = arith.constant 0 : index
    %c0_7 = arith.constant 0 : index
    %3 = vector.load %arg2[%c0_5, %c0_6, %c0_7] : memref<3x32x32xf32, #tpu.memory_space<vmem>>, vector<1x32x32xf32>
    %4 = vector.shape_cast %3 : vector<1x32x32xf32> to vector<32x32xf32>
    %c0_8 = arith.constant 0 : index
    %c0_9 = arith.constant 0 : index
    %c0_10 = arith.constant 0 : index
    %5 = vector.load %arg3[%c0_8, %c0_9, %c0_10] : memref<3x1x32xf32, #tpu.memory_space<vmem>>, vector<1x1x32xf32>
    %6 = vector.shape_cast %5 : vector<1x1x32xf32> to vector<1x32xf32>
    %cst = arith.constant dense<0.000000e+00> : vector<8x32xf32>
    %7 = tpu.matmul %0, %4, %cst {dimension_numbers = #tpu.dot_dimension_numbers<[1], [0], [0], [1], [0, 0, 1, 1], [], []>} : vector<8x32xf32>, vector<32x32xf32>, vector<8x32xf32> -> vector<8x32xf32>
    %8 = vector.broadcast %6 : vector<1x32xf32> to vector<8x32xf32>
    %9 = arith.addf %7, %8 : vector<8x32xf32>
    %10 = arith.mulf %0, %9 : vector<8x32xf32>
    %11 = arith.addf %10, %0 : vector<8x32xf32>
    %c1 = arith.constant 1 : index
    %c0_11 = arith.constant 0 : index
    %c0_12 = arith.constant 0 : index
    %12 = vector.load %arg2[%c1, %c0_11, %c0_12] : memref<3x32x32xf32, #tpu.memory_space<vmem>>, vector<1x32x32xf32>
    %13 = vector.shape_cast %12 : vector<1x32x32xf32> to vector<32x32xf32>
    %c1_13 = arith.constant 1 : index
    %c0_14 = arith.constant 0 : index
    %c0_15 = arith.constant 0 : index
    %14 = vector.load %arg3[%c1_13, %c0_14, %c0_15] : memref<3x1x32xf32, #tpu.memory_space<vmem>>, vector<1x1x32xf32>
    %15 = vector.shape_cast %14 : vector<1x1x32xf32> to vector<1x32xf32>
    %cst_16 = arith.constant dense<0.000000e+00> : vector<8x32xf32>
    %16 = tpu.matmul %11, %13, %cst_16 {dimension_numbers = #tpu.dot_dimension_numbers<[1], [0], [0], [1], [0, 0, 1, 1], [], []>} : vector<8x32xf32>, vector<32x32xf32>, vector<8x32xf32> -> vector<8x32xf32>
    %17 = vector.broadcast %15 : vector<1x32xf32> to vector<8x32xf32>
    %18 = arith.addf %16, %17 : vector<8x32xf32>
    %19 = arith.mulf %0, %18 : vector<8x32xf32>
    %20 = arith.addf %19, %11 : vector<8x32xf32>
    %c2 = arith.constant 2 : index
    %c0_17 = arith.constant 0 : index
    %c0_18 = arith.constant 0 : index
    %21 = vector.load %arg2[%c2, %c0_17, %c0_18] : memref<3x32x32xf32, #tpu.memory_space<vmem>>, vector<1x32x32xf32>
    %22 = vector.shape_cast %21 : vector<1x32x32xf32> to vector<32x32xf32>
    %c2_19 = arith.constant 2 : index
    %c0_20 = arith.constant 0 : index
    %c0_21 = arith.constant 0 : index
    %23 = vector.load %arg3[%c2_19, %c0_20, %c0_21] : memref<3x1x32xf32, #tpu.memory_space<vmem>>, vector<1x1x32xf32>
    %24 = vector.shape_cast %23 : vector<1x1x32xf32> to vector<1x32xf32>
    %cst_22 = arith.constant dense<0.000000e+00> : vector<8x32xf32>
    %25 = tpu.matmul %20, %22, %cst_22 {dimension_numbers = #tpu.dot_dimension_numbers<[1], [0], [0], [1], [0, 0, 1, 1], [], []>} : vector<8x32xf32>, vector<32x32xf32>, vector<8x32xf32> -> vector<8x32xf32>
    %26 = vector.broadcast %24 : vector<1x32xf32> to vector<8x32xf32>
    %27 = arith.addf %25, %26 : vector<8x32xf32>
    %28 = arith.mulf %0, %27 : vector<8x32xf32>
    %29 = arith.addf %28, %20 : vector<8x32xf32>
    %30 = vector.broadcast %1 : vector<1x32xf32> to vector<8x32xf32>
    %31 = arith.mulf %29, %30 : vector<8x32xf32>
    %cst_23 = arith.constant dense<0.000000e+00> : vector<8xf32>
    %32 = vector.multi_reduction <add>, %31, %cst_23 [1] : vector<8x32xf32> to vector<8xf32>
    %33 = vector.shape_cast %32 : vector<8xf32> to vector<8x1xf32>
    %34 = vector.broadcast %2 : vector<1x1xf32> to vector<8x1xf32>
    %35 = arith.addf %33, %34 : vector<8x1xf32>
    %c0_24 = arith.constant 0 : index
    %c0_25 = arith.constant 0 : index
    %36 = vector.load %arg6[%c0_24, %c0_25] : memref<8x1xf32, #tpu.memory_space<vmem>>, vector<8x1xf32>
    tpu.vector_store %arg6[%c0_24, %c0_25], %35 {strides = array<i32>} : memref<8x1xf32, #tpu.memory_space<vmem>>, vector<8x1xf32>,
    return
  }
  func.func @transform_0(%arg0: i32) -> (i32, i32) {
    %c0_i32 = arith.constant 0 : i32
    %c0_i32_0 = arith.constant 0 : i32
    return %arg0, %c0_i32 : i32, i32
  }
  func.func @transform_1(%arg0: i32) -> (i32, i32, i32) {
    %c0_i32 = arith.constant 0 : i32
    %c0_i32_0 = arith.constant 0 : i32
    %c0_i32_1 = arith.constant 0 : i32
    %c0_i32_2 = arith.constant 0 : i32
    return %c0_i32, %c0_i32_0, %c0_i32_1 : i32, i32, i32
  }
  func.func @transform_2(%arg0: i32) -> (i32, i32, i32) {
    %c0_i32 = arith.constant 0 : i32
    %c0_i32_0 = arith.constant 0 : i32
    %c0_i32_1 = arith.constant 0 : i32
    %c0_i32_2 = arith.constant 0 : i32
    return %c0_i32, %c0_i32_0, %c0_i32_1 : i32, i32, i32
  }
  func.func @transform_3(%arg0: i32) -> (i32, i32) {
    %c0_i32 = arith.constant 0 : i32
    %c0_i32_0 = arith.constant 0 : i32
    %c0_i32_1 = arith.constant 0 : i32
    return %c0_i32, %c0_i32_0 : i32, i32
  }
  func.func @transform_4(%arg0: i32) -> (i32, i32) {
    %c0_i32 = arith.constant 0 : i32
    %c0_i32_0 = arith.constant 0 : i32
    %c0_i32_1 = arith.constant 0 : i32
    return %c0_i32, %c0_i32_0 : i32, i32
  }
  func.func @transform_5(%arg0: i32) -> (i32, i32) {
    %c0_i32 = arith.constant 0 : i32
    %c0_i32_0 = arith.constant 0 : i32
    return %arg0, %c0_i32 : i32, i32
  }
}

</mosaic_0001>

<llo_original>
// kernel: tpu_custom_call.1
$region0: #{tpu_custom_call.1}
  #allocation0 [shape = 'u32[]', space=smem, size = 0x4, offset = 0x4, fixed_abs, tag = 'smem constant byte address 0x4 - core index']
  #allocation1 [shape = 'u32[72,128]{1,0:T(1,128)}', space=vmem, size = 0x9000, scoped, tag = 'internal scratch']
  #allocation2 [shape = 'f32[1,1]{1,0:T(1,128)S(1)}', space=vmem, size = 0x200, scoped, tag = 'scoped memory for tpu_custom_call.1']
  %s0 = inlined_call_operand.hbm [shape: f32[24,32], index: 0, kind: input, shape index: {}]
  %s1 = inlined_call_operand.hbm [shape: f32[3,32,32], index: 1, kind: input, shape index: {}]
  %s2 = inlined_call_operand.vmem [shape: f32[3,1,32], index: 2, kind: input, shape index: {}]
  %s3 = inlined_call_operand.vmem [shape: f32[1,32], index: 3, kind: input, shape index: {}]
  %s4 = inlined_call_operand.<no memory space> [shape: f32[1,1], index: 4, kind: input, shape index: {}]
  %s5 = inlined_call_operand.vmem [shape: f32[24,1], index: 5, kind: output, shape index: {}]
  %s6 = sld [smem:[#allocation0]]
  $region61: #{tpu_custom_call.1} parent=0
    _
  %s8 = ssub.s32 1, %s6
  %s9 = scalar_select 0, %s8, %s6
  %v10 = vstv %s4
  %11 = vst [vmem:[#allocation2] sm:$0x1] %v10
  $region1: #{tpu_custom_call.1} parent=0
    #allocation3 [shape = 'u8[8192]{0}', space=vmem, size = 0x2000, scoped, tag = 'input window, operand 0']
    #allocation4 [shape = 's32[2]{0}', space=sflag, size = 0x8, scoped, tag = 'scoped memory for tpu_custom_call.1']
    #allocation5 [shape = 'u8[49152]{0}', space=vmem, size = 0xc000, scoped, tag = 'input window, operand 1, single buffered']
    #allocation6 [shape = 's32[1]{0}', space=sflag, size = 0x4, scoped, tag = 'scoped memory for tpu_custom_call.1']
    %12 = vsyncpa [#allocation4], 0
    %s13 = scalar_lea.sflag [#allocation4], 1
    %14 = vsyncpa %s13, 0
    %15 = vsyncpa [#allocation6], 0
    loop: start=0, step=1, limit=5
    $region2: #{tpu_custom_call.1} parent=1 // loop_pre_header
      _
    $region3: #{tpu_custom_call.1} parent=1 // loop_header
      %s17 = sphi 0, %s21
      %p18 = scmp.ge.s32.totalorder %s17, 5
      %s27 = sphi 0, %s29
      %s30 = sphi 0, %s27
      %s31 = sphi 0, %s30
      %s47 = sphi 0, %s31
      %s51 = sphi 0, %s51
      %s53 = sphi 0, %s51
      %s54 = sphi 0, %s53
      %s68 = sphi 0, %s54
      %s72 = sphi 0, %s72
      %s74 = sphi 0, %s72
      %s75 = sphi 0, %s74
      %s89 = sphi 0, %s75
      %s93 = sphi 0, %s93
      %s95 = sphi 0, %s93
      %s96 = sphi 0, %s95
      %s110 = sphi 0, %s96
      %s114 = sphi 0, %s114
      %s116 = sphi 0, %s114
      %s117 = sphi 0, %s116
      %s131 = sphi 0, %s117
      %s137 = sphi 0, %s139
      %s140 = sphi 0, %s137
      %s141 = sphi 0, %s140
      %s157 = sphi 0, %s141
    $region4: #{tpu_custom_call.1} parent=1 // loop_header_branch
      %20 = sbr.rel (%p18) target = $region8
    $region5: #{tpu_custom_call.1} parent=1 // loop_body
      %s22 = ssub.s32 %s17, 1
      %s23 = ssub.s32 %s17, 2
      %s24 = sadd.s32 %s17, 1
      %s25 = ssub.s32 %s17, %s24
      %p26 = scmp.eq.s32.totalorder %s25, 0
      %s28 = sadd.s32 %s27, 1
      %s29 = scalar_select %p26, %s27, %s28
      %p32 = pneg %p26
      %p33 = scmp.eq.s32.totalorder %s17, 2
      %p34 = por %p32, %p33
      %p35 = scmp.ne.s32.totalorder %s27, %s30
      %p36 = scmp.eq.s32.totalorder %s17, 0
      %p37 = por %p35, %p36
      %p38 = scmp.ne.s32.totalorder %s27, %s30
      %p39 = scmp.eq.s32.totalorder %s22, 2
      %p40 = por %p38, %p39
      %p41 = scmp.ne.s32.totalorder %s30, %s31
      %p42 = scmp.eq.s32.totalorder %s22, 0
      %p43 = por %p41, %p42
      %p44 = scmp.ne.s32.totalorder %s30, %s31
      %p45 = scmp.eq.s32.totalorder %s23, 2
      %p46 = por %p44, %p45
      %p48 = scmp.ne.s32.totalorder %s31, %s47
      %p49 = scmp.eq.s32.totalorder %s23, 0
      %p50 = por %p48, %p49
      %s52 = sadd.s32 %s51, 1
      %p55 = scmp.eq.s32.totalorder %s17, 2
      %p56 = scmp.ne.s32.totalorder %s51, %s53
      %p57 = scmp.eq.s32.totalorder %s17, 0
      %p58 = por %p56, %p57
      %p59 = scmp.ne.s32.totalorder %s51, %s53
      %p60 = scmp.eq.s32.totalorder %s22, 2
      %p61 = por %p59, %p60
      %p62 = scmp.ne.s32.totalorder %s53, %s54
      %p63 = scmp.eq.s32.totalorder %s22, 0
      %p64 = por %p62, %p63
      %p65 = scmp.ne.s32.totalorder %s53, %s54
      %p66 = scmp.eq.s32.totalorder %s23, 2
      %p67 = por %p65, %p66
      %p69 = scmp.ne.s32.totalorder %s54, %s68
      %p70 = scmp.eq.s32.totalorder %s23, 0
      %p71 = por %p69, %p70
      %s73 = sadd.s32 %s72, 1
      %p76 = scmp.eq.s32.totalorder %s17, 2
      %p77 = scmp.ne.s32.totalorder %s72, %s74
      %p78 = scmp.eq.s32.totalorder %s17, 0
      %p79 = por %p77, %p78
      %p80 = scmp.ne.s32.totalorder %s72, %s74
      %p81 = scmp.eq.s32.totalorder %s22, 2
      %p82 = por %p80, %p81
      %p83 = scmp.ne.s32.totalorder %s74, %s75
      %p84 = scmp.eq.s32.totalorder %s22, 0
      %p85 = por %p83, %p84
      %p86 = scmp.ne.s32.totalorder %s74, %s75
      %p87 = scmp.eq.s32.totalorder %s23, 2
      %p88 = por %p86, %p87
      %p90 = scmp.ne.s32.totalorder %s75, %s89
      %p91 = scmp.eq.s32.totalorder %s23, 0
      %p92 = por %p90, %p91
      %s94 = sadd.s32 %s93, 1
      %p97 = scmp.eq.s32.totalorder %s17, 2
      %p98 = scmp.ne.s32.totalorder %s93, %s95
      %p99 = scmp.eq.s32.totalorder %s17, 0
      %p100 = por %p98, %p99
      %p101 = scmp.ne.s32.totalorder %s93, %s95
      %p102 = scmp.eq.s32.totalorder %s22, 2
      %p103 = por %p101, %p102
      %p104 = scmp.ne.s32.totalorder %s95, %s96
      %p105 = scmp.eq.s32.totalorder %s22, 0
      %p106 = por %p104, %p105
      %p107 = scmp.ne.s32.totalorder %s95, %s96
      %p108 = scmp.eq.s32.totalorder %s23, 2
      %p109 = por %p107, %p108
      %p111 = scmp.ne.s32.totalorder %s96, %s110
      %p112 = scmp.eq.s32.totalorder %s23, 0
      %p113 = por %p111, %p112
      %s115 = sadd.s32 %s114, 1
      %p118 = scmp.eq.s32.totalorder %s17, 2
      %p119 = scmp.ne.s32.totalorder %s114, %s116
      %p120 = scmp.eq.s32.totalorder %s17, 0
      %p121 = por %p119, %p120
      %p122 = scmp.ne.s32.totalorder %s114, %s116
      %p123 = scmp.eq.s32.totalorder %s22, 2
      %p124 = por %p122, %p123
      %p125 = scmp.ne.s32.totalorder %s116, %s117
      %p126 = scmp.eq.s32.totalorder %s22, 0
      %p127 = por %p125, %p126
      %p128 = scmp.ne.s32.totalorder %s116, %s117
      %p129 = scmp.eq.s32.totalorder %s23, 2
      %p130 = por %p128, %p129
      %p132 = scmp.ne.s32.totalorder %s117, %s131
      %p133 = scmp.eq.s32.totalorder %s23, 0
      %p134 = por %p132, %p133
      %s135 = ssub.s32 %s17, %s24
      %p136 = scmp.eq.s32.totalorder %s135, 0
      %s138 = sadd.s32 %s137, 1
      %s139 = scalar_select %p136, %s137, %s138
      %p142 = pneg %p136
      %p143 = scmp.eq.s32.totalorder %s17, 2
      %p144 = por %p142, %p143
      %p145 = scmp.ne.s32.totalorder %s137, %s140
      %p146 = scmp.eq.s32.totalorder %s17, 0
      %p147 = por %p145, %p146
      %p148 = scmp.ne.s32.totalorder %s137, %s140
      %p149 = scmp.eq.s32.totalorder %s22, 2
      %p150 = por %p148, %p149
      %p151 = scmp.ne.s32.totalorder %s140, %s141
      %p152 = scmp.eq.s32.totalorder %s22, 0
      %p153 = por %p151, %p152
      %p154 = scmp.ne.s32.totalorder %s140, %s141
      %p155 = scmp.eq.s32.totalorder %s23, 2
      %p156 = por %p154, %p155
      %p158 = scmp.ne.s32.totalorder %s141, %s157
      %p159 = scmp.eq.s32.totalorder %s23, 0
      %p160 = por %p158, %p159
      %p161 = scmp.le.s32.totalorder 1, %s17
      %p162 = scmp.lt.s32.totalorder %s17, 4
      %p163 = pnand %p161, %p162
      %p164 = pneg %p163
      // Predicated region
      $region9: #{tpu_custom_call.1} parent=5 // pred_check
        _
      $region10: #{tpu_custom_call.1} parent=5 // pred_check_branch
        %166 = sbr.rel (%p163) target = $region12
      $region11: #{tpu_custom_call.1} parent=5 // pred_region
        %s167 = ssub.s32 %s17, 1
        // Predicated region
        $region13: #{tpu_custom_call.1} parent=11 // pred_check
          %p168 = pneg %p64
        $region14: #{tpu_custom_call.1} parent=11 // pred_check_branch
          %170 = sbr.rel (%p168) target = $region16
        $region15: #{tpu_custom_call.1} parent=11 // pred_region
          %172 = vsyncadd [#allocation6], 0
          %s173 = sshll.u32 %s1, 4
          %s174 = int_to_ptr.hbm [resolvable:$true] %s173
          %s175 = sshll.u32 [#allocation5], 4
          %s176 = int_to_ptr.vmem [resolvable:$true] %s175
          %181 = dma.hbm_to_vmem [thread:$0]  %s174, 1536, %s176, [#allocation6], 128, 128, 8
        $region16: #{tpu_custom_call.1} parent=11 // pred_fallthru
          _
        // Predicated region
        $region17: #{tpu_custom_call.1} parent=11 // pred_check
          %p182 = pneg %p85
        $region18: #{tpu_custom_call.1} parent=11 // pred_check_branch
          %184 = sbr.rel (%p182) target = $region20
        $region19: #{tpu_custom_call.1} parent=11 // pred_region
          _
        $region20: #{tpu_custom_call.1} parent=11 // pred_fallthru
          _
        // Predicated region
        $region21: #{tpu_custom_call.1} parent=11 // pred_check
          %p185 = pneg %p106
        $region22: #{tpu_custom_call.1} parent=11 // pred_check_branch
          %187 = sbr.rel (%p185) target = $region24
        $region23: #{tpu_custom_call.1} parent=11 // pred_region
          _
        $region24: #{tpu_custom_call.1} parent=11 // pred_fallthru
          _
        // Predicated region
        $region25: #{tpu_custom_call.1} parent=11 // pred_check
          %p188 = pneg %p127
        $region26: #{tpu_custom_call.1} parent=11 // pred_check_branch
          %190 = sbr.rel (%p188) target = $region28
        $region27: #{tpu_custom_call.1} parent=11 // pred_region
          _
        $region28: #{tpu_custom_call.1} parent=11 // pred_fallthru
          _
      $region12: #{tpu_custom_call.1} parent=5 // pred_fallthru
        _
      %p191 = scmp.lt.s32.totalorder %s17, 3
      // Predicated region
      $region29: #{tpu_custom_call.1} parent=5 // pred_check
        %p192 = pneg %p191
      $region30: #{tpu_custom_call.1} parent=5 // pred_check_branch
        %194 = sbr.rel (%p192) target = $region32
      $region31: #{tpu_custom_call.1} parent=5 // pred_region
        // Predicated region
        $region33: #{tpu_custom_call.1} parent=31 // pred_check
          %p195 = pneg %p37
        $region34: #{tpu_custom_call.1} parent=31 // pred_check_branch
          %197 = sbr.rel (%p195) target = $region36
        $region35: #{tpu_custom_call.1} parent=31 // pred_region
          %s198 = sand.u32 %s27, 1
          %s199 = scalar_lea.sflag [#allocation4], %s198
          %s200 = sand.u32 %s27, 1
          %s201 = smul.addr %s200, 8
          %s202 = scalar_lea.vmem [#allocation3], %s201
          %204 = vsyncadd %s199, 0
          %s205 = smul.addr %s17, 8
          %s206 = scalar_lea.hbm %s0, %s205
          %s208 = sshll.u32 %s206, 4
          %s209 = int_to_ptr.hbm [resolvable:$true] %s208
          %s210 = sshll.u32 %s202, 4
          %s211 = int_to_ptr.vmem [resolvable:$true] %s210
          %213 = dma.hbm_to_vmem [thread:$0]  %s209, 128, %s211, %s199
        $region36: #{tpu_custom_call.1} parent=31 // pred_fallthru
          _
      $region32: #{tpu_custom_call.1} parent=5 // pred_fallthru
        _
      %p214 = scmp.le.s32.totalorder 1, %s17
      %p215 = scmp.lt.s32.totalorder %s17, 4
      %p216 = pnand %p214, %p215
      %p217 = pneg %p216
      // Predicated region
      $region37: #{tpu_custom_call.1} parent=5 // pred_check
        _
      $region38: #{tpu_custom_call.1} parent=5 // pred_check_branch
        %219 = sbr.rel (%p216) target = $region40
      $region39: #{tpu_custom_call.1} parent=5 // pred_region
        %s220 = ssub.s32 %s17, 1
        %s221 = sand.u32 %s30, 1
        %s222 = scalar_lea.sflag [#allocation4], %s221
        %s223 = sand.u32 %s30, 1
        %s224 = smul.addr %s223, 8
        %s225 = scalar_lea.vmem [#allocation3], %s224
        // Predicated region
        $region41: #{tpu_custom_call.1} parent=39 // pred_check
          %p226 = pneg %p43
        $region42: #{tpu_custom_call.1} parent=39 // pred_check_branch
          %228 = sbr.rel (%p226) target = $region44
        $region43: #{tpu_custom_call.1} parent=39 // pred_region
          %230 = dma.done %s222, 128
        $region44: #{tpu_custom_call.1} parent=39 // pred_fallthru
          _
        // Predicated region
        $region45: #{tpu_custom_call.1} parent=39 // pred_check
          %p231 = pneg %p64
        $region46: #{tpu_custom_call.1} parent=39 // pred_check_branch
          %233 = sbr.rel (%p231) target = $region48
        $region47: #{tpu_custom_call.1} parent=39 // pred_region
          %235 = dma.done [#allocation6], 1536
        $region48: #{tpu_custom_call.1} parent=39 // pred_fallthru
          _
        %s236 = sand.u32 %s30, 1
        %s237 = scalar_lea.sflag [#allocation4], %s236
        %s238 = sand.u32 %s30, 1
        %s239 = smul.addr %s238, 8
        %s240 = scalar_lea.vmem [#allocation3], %s239
        %p241 = pneg %p43
        %p242 = pneg %p40
        %p243 = pneg %p64
        %p244 = pneg %p61
        %p245 = pneg %p85
        %p246 = pneg %p82
        %p247 = pneg %p106
        %p248 = pneg %p103
        %p249 = pneg %p127
        %p250 = pneg %p124
        %p251 = pneg %p153
        %p252 = pneg %p150
        %p253 = scmp.lt.s32.totalorder %s22, 2
        %s254 = scalar_select %p253, %s22, 2
        %s255 = smul.addr %s254, 8
        %s256 = scalar_lea.vmem %s5, %s255
        %p257 = scmp.lt.s32.totalorder %s22, 2
        %s258 = scalar_select %p257, %s22, 2
        %s259 = smul.addr %s258, 8
        %s260 = scalar_lea.vmem %s5, %s259
        %v261 = vld [vmem:[%s225] sm:$0xff]
        %v262 = vld [vmem:[%s3] sm:$0x1]
        %v263 = vld [vmem:[#allocation2] sm:$0x1]
        %v264 = vld [vmem:[#allocation5] sm:$0xff]
        %v265 = vld [vmem:[#allocation5 + $0x8] sm:$0xff]
        %v266 = vld [vmem:[#allocation5 + $0x10] sm:$0xff]
        %v267 = vld [vmem:[#allocation5 + $0x18] sm:$0xff]
        %v268 = vld [vmem:[%s2] sm:$0x1]
        %v270 = vperm.slane %v268, 0
        %vm272 = vcmask 261120
        %v274 = vsel %vm272, %v261, 0
        %276 = vmatpush.msra.mxu0 0.0
        %277 = vmatpush.msra.mxu0 0.0
        %278 = vmatpush.msra.mxu0 0.0
        %279 = vmatpush.msra.mxu0 0.0
        %280 = vmatpush.msra.mxu0 0.0
        %281 = vmatpush.msra.mxu0 0.0
        %282 = vmatpush.msra.mxu0 0.0
        %283 = vmatpush.msra.mxu0 0.0
        %284 = vmatpush.msra.mxu0 0.0
        %285 = vmatpush.msra.mxu0 0.0
        %286 = vmatpush.msra.mxu0 0.0
        %287 = vmatpush.msra.mxu0 0.0
        %288 = vmatpush.msra.mxu0 %v267
        %289 = vmatpush.msra.mxu0 %v266
        %290 = vmatpush.msra.mxu0 %v265
        %291 = vmatpush.msra.mxu0 %v264
        %292 = vmatmul.f32.gmra.mxu0 %v274
        %v293 = vpop.f32.mrf.mxu0
        %v294 = vadd.f32 %v270, %v293
        %295 = vdwg.mxu0
        %v296 = vmul.f32 %v261, %v294
        %v297 = vadd.f32 %v296, %v261
        %s298 = scalar_lea.vmem [#allocation5], 32
        %v299 = vld [vmem:[%s298] sm:$0xff]
        %v300 = vld [vmem:[%s298 + $0x8] sm:$0xff]
        %v301 = vld [vmem:[%s298 + $0x10] sm:$0xff]
        %v302 = vld [vmem:[%s298 + $0x18] sm:$0xff]
        %s303 = scalar_lea.vmem %s2, 1
        %v304 = vld [vmem:[%s303] sm:$0x1]
        %v306 = vperm.slane %v304, 0
        %v309 = vsel %vm272, %v297, 0
        %311 = vmatpush.msra.mxu0 0.0
        %312 = vmatpush.msra.mxu0 0.0
        %313 = vmatpush.msra.mxu0 0.0
        %314 = vmatpush.msra.mxu0 0.0
        %315 = vmatpush.msra.mxu0 0.0
        %316 = vmatpush.msra.mxu0 0.0
        %317 = vmatpush.msra.mxu0 0.0
        %318 = vmatpush.msra.mxu0 0.0
        %319 = vmatpush.msra.mxu0 0.0
        %320 = vmatpush.msra.mxu0 0.0
        %321 = vmatpush.msra.mxu0 0.0
        %322 = vmatpush.msra.mxu0 0.0
        %323 = vmatpush.msra.mxu0 %v302
        %324 = vmatpush.msra.mxu0 %v301
        %325 = vmatpush.msra.mxu0 %v300
        %326 = vmatpush.msra.mxu0 %v299
        %327 = vmatmul.f32.gmra.mxu0 %v309
        %v328 = vpop.f32.mrf.mxu0
        %v329 = vadd.f32 %v306, %v328
        %330 = vdwg.mxu0
        %v331 = vmul.f32 %v261, %v329
        %v332 = vadd.f32 %v331, %v297
        %s333 = scalar_lea.vmem [#allocation5], 64
        %v334 = vld [vmem:[%s333] sm:$0xff]
        %v335 = vld [vmem:[%s333 + $0x8] sm:$0xff]
        %v336 = vld [vmem:[%s333 + $0x10] sm:$0xff]
        %v337 = vld [vmem:[%s333 + $0x18] sm:$0xff]
        %s338 = scalar_lea.vmem %s2, 2
        %v339 = vld [vmem:[%s338] sm:$0x1]
        %v341 = vperm.slane %v339, 0
        %v344 = vsel %vm272, %v332, 0
        %346 = vmatpush.msra.mxu0 0.0
        %347 = vmatpush.msra.mxu0 0.0
        %348 = vmatpush.msra.mxu0 0.0
        %349 = vmatpush.msra.mxu0 0.0
        %350 = vmatpush.msra.mxu0 0.0
        %351 = vmatpush.msra.mxu0 0.0
        %352 = vmatpush.msra.mxu0 0.0
        %353 = vmatpush.msra.mxu0 0.0
        %354 = vmatpush.msra.mxu0 0.0
        %355 = vmatpush.msra.mxu0 0.0
        %356 = vmatpush.msra.mxu0 0.0
        %357 = vmatpush.msra.mxu0 0.0
        %358 = vmatpush.msra.mxu0 %v337
        %359 = vmatpush.msra.mxu0 %v336
        %360 = vmatpush.msra.mxu0 %v335
        %361 = vmatpush.msra.mxu0 %v334
        %362 = vmatmul.f32.gmra.mxu0 %v344
        %v363 = vpop.f32.mrf.mxu0
        %v364 = vadd.f32 %v341, %v363
        %365 = vdwg.mxu0
        %v366 = vmul.f32 %v261, %v364
        %v367 = vadd.f32 %v366, %v332
        %v369 = vperm.slane %v262, 0
        %v371 = vmul.f32 %v367, %v369
        %v372 = vsel %vm272, %v371, 0.0
        %373 = vadd.xlane.f32.xlu0 %v372
        %v374 = vpop.xlane.xlu0 %373
        %v376 = vperm.slane %v263, 0
        %v378 = vadd.f32 %v374, %v376
        %vm379 = vcmask 7168
        %380 = vst.msk [vmem:[%s260] sm:$0xff] %vm379, %v378
        %p381 = scmp.lt.s32.totalorder %s22, 2
        %s382 = scalar_select %p381, %s22, 2
        %s383 = smul.addr %s382, 8
        %s384 = scalar_lea.vmem %s5, %s383
        // Predicated region
        $region49: #{tpu_custom_call.1} parent=39 // pred_check
          %p385 = pneg %p150
        $region50: #{tpu_custom_call.1} parent=39 // pred_check_branch
          %387 = sbr.rel (%p385) target = $region52
        $region51: #{tpu_custom_call.1} parent=39 // pred_region
          _
        $region52: #{tpu_custom_call.1} parent=39 // pred_fallthru
          _
      $region40: #{tpu_custom_call.1} parent=5 // pred_fallthru
        _
      %p388 = scmp.le.s32.totalorder 2, %s17
      // Predicated region
      $region53: #{tpu_custom_call.1} parent=5 // pred_check
        %p389 = pneg %p388
      $region54: #{tpu_custom_call.1} parent=5 // pred_check_branch
        %391 = sbr.rel (%p389) target = $region56
      $region55: #{tpu_custom_call.1} parent=5 // pred_region
        %s392 = ssub.s32 %s17, 2
        // Predicated region
        $region57: #{tpu_custom_call.1} parent=55 // pred_check
          %p393 = pneg %p156
        $region58: #{tpu_custom_call.1} parent=55 // pred_check_branch
          %395 = sbr.rel (%p393) target = $region60
        $region59: #{tpu_custom_call.1} parent=55 // pred_region
          %p396 = scmp.lt.s32.totalorder %s23, 2
          %s397 = scalar_select %p396, %s23, 2
          %s398 = smul.addr %s397, 8
          %s399 = scalar_lea.vmem %s5, %s398
        $region60: #{tpu_custom_call.1} parent=55 // pred_fallthru
          _
      $region56: #{tpu_custom_call.1} parent=5 // pred_fallthru
        _
    $region6: #{tpu_custom_call.1} parent=1 // loop_footer
      %s21 = sadd.s32 1, %s17
    $region7: #{tpu_custom_call.1} parent=1 // loop_footer_branch
      %16 = sbr.rel target = $region3
    $region8: #{tpu_custom_call.1} parent=1 // loop_exit
      _
    %400 = vsyncpa [#allocation4], 1
    %s401 = scalar_lea.sflag [#allocation4], 1
    %402 = vsyncpa %s401, 1
    %403 = vsyncpa [#allocation6], 1

</llo_original>
